<compile_context>
chip_gen: v6e
topology: v6e:2x2x1
jax: 0.10.0
libtpu: 0.0.40
codegen_flags: <defaults>
</compile_context>

<pallas_src>
import functools

import jax
import jax.numpy as jnp
from jax import lax
from jax.experimental import pallas as pl
from jax.experimental.pallas import tpu as pltpu

IGNORE_INDEX = 255
THRESH = 0.7
MIN_KEPT = 256

# Negated-prob sentinel for ignore_index pixels; strictly smaller than any real
# -softmax prob (>= -1.0), so it is never kept and never selected by top_k
# unless there are fewer than min_kept valid pixels.
_INVALID_NEG_PROB = -2.0
# Prob threshold that keeps every valid pixel (prob <= 1.0) but no invalid one.
_KEEP_ALL_THRESHOLD = 1.5


def _round_up(x, m):
    return (x + m - 1) // m * m


def _choose_tile(hw, bytes_per_pixel, max_tile, vmem_budget_bytes):
    """Largest lane tile (multiple of 128) whose double-buffered blocks fit the budget."""
    cap = (vmem_budget_bytes // (2 * bytes_per_pixel)) // 128 * 128
    t = min(max_tile, max(cap, 128), _round_up(hw, 128))
    return max(128, (t // 128) * 128)


# ----------------------------------------------------------------------------
# Kernel 1: per-pixel softmax stats.
#   inputs : logits (b, c, hw)  block (1, c, TN)   (cast to f32 in-kernel)
#            target (b, 1, hw)  block (1, 1, TN)   int32
#   outputs: nll      (b,1,hw)  block (1, 1, TN)   -log_softmax[gt]
#            neg_prob (b,1,hw)  block (1, 1, TN)   -softmax[gt], or -2.0 invalid
# No tail masking needed: OOB lanes of the trailing partial block are discarded
# by the Pallas writeback, and all math is lane-local (no cross-lane leakage).
# ----------------------------------------------------------------------------
def _pixel_stats_kernel(logits_ref, target_ref, nll_ref, negp_ref, *, ignore_index):
    x = logits_ref[...].astype(jnp.float32)             # (1, C, TN)
    tgt = target_ref[...]                                # (1, 1, TN) int32
    valid = tgt != ignore_index
    tgt_c = jnp.where(valid, tgt, 0)

    # stable softmax / logsumexp over channels (sublane reduction)
    m = jnp.max(x, axis=1, keepdims=True)                # (1, 1, TN)
    e = jnp.exp(x - m)                                   # (1, C, TN)
    s = jnp.sum(e, axis=1, keepdims=True)                # (1, 1, TN)

    # gather logit at the ground-truth class via one-hot compare
    chan = lax.broadcasted_iota(jnp.int32, x.shape, 1)
    onehot = chan == tgt_c                               # (1, C, TN)
    logit_gt = jnp.sum(jnp.where(onehot, x, 0.0), axis=1, keepdims=True)

    nll = jnp.log(s) + m - logit_gt                      # logsumexp - logit[gt]
    p_gt = jnp.exp(logit_gt - m) / s                     # one extra EUP exp, no 2nd C-sum

    nll_ref[...] = nll
    negp_ref[...] = jnp.where(valid, -p_gt, jnp.float32(_INVALID_NEG_PROB))


# ----------------------------------------------------------------------------
# Kernel 2: tiled masked-mean reduction with per-batch accumulators.
#   kept = (-prob >= -threshold) & in_bounds; threshold encodes both the OHEM
#   threshold and the "keep all valid" case via _KEEP_ALL_THRESHOLD.
#   Outputs (b,1,128): every lane of row bi holds that batch's running total.
# ----------------------------------------------------------------------------
def _ohem_reduce_kernel(thr_ref, negp_ref, nll_ref, loss_ref, cnt_ref, *, hw, tile_n):
    ni = pl.program_id(1)

    @pl.when(ni == 0)
    def _init():
        loss_ref[...] = jnp.zeros_like(loss_ref)
        cnt_ref[...] = jnp.zeros_like(cnt_ref)

    neg_thr = -thr_ref[0]                                # SMEM scalar
    negp = negp_ref[...]                                 # (1, 1, TN2)
    nll = nll_ref[...]                                   # (1, 1, TN2)

    # Mask the ragged tail tile: OOB lanes of the input block are garbage, so
    # exclude them from kept AND give them a finite contribution (where-select).
    lane = lax.broadcasted_iota(jnp.int32, negp.shape, 2)
    in_bounds = (ni * tile_n + lane) < hw
    kept = jnp.logical_and(in_bounds, negp >= neg_thr)

    # TODO(synk): per-batch f32 running sums are exact for < ~16.7M kept pixels
    # per image; switch to lane-parallel partials / int32 count beyond that.
    loss_ref[...] = loss_ref[...] + jnp.sum(jnp.where(kept, nll, 0.0))
    cnt_ref[...] = cnt_ref[...] + jnp.sum(kept.astype(jnp.float32))


def ohem_cross_entropy_2d(pred, target, *, ignore_index=IGNORE_INDEX,
                          thresh=THRESH, min_kept=MIN_KEPT,
                          tile_n=None, tile_n2=None):
    """pred: (b, c, h, w) float logits (NCHW, f32 or bf16); target: (b, h, w) int labels."""
    b, c, h, w = pred.shape
    hw = h * w
    n_real = b * hw
    logit_bytes = jnp.dtype(pred.dtype).itemsize

    # Pass-1 tile: up to 32768 lanes, capped so double-buffered blocks
    # (logits + target + two f32 outputs) stay within a ~7 MB budget — fits the
    # default scoped VMEM on v5e (16 MiB), v6e and v7x (32 MiB) without flags.
    if tile_n is None:
        tile_n = _choose_tile(hw, c * logit_bytes + 4 + 8, 32768, 7 * 1024 * 1024)
    n_tiles = pl.cdiv(hw, tile_n)

    # Pass-2 tile: only 8 B/pixel streamed, so use very large blocks (~1 MB/step).
    if tile_n2 is None:
        tile_n2 = _choose_tile(hw, 8, 131072, 4 * 1024 * 1024)
    n_tiles2 = pl.cdiv(hw, tile_n2)

    # Free reshapes — no transpose, no pad, no dtype copy (cast happens in-kernel;
    # bf16 logits stay bf16 in HBM).
    logits = pred.reshape(b, c, hw)
    target3 = target.reshape(b, 1, hw).astype(jnp.int32)

    # ---- pass 1: per-pixel nll + negated gt-class prob ----------------------
    nll, neg_prob = pl.pallas_call(
        functools.partial(_pixel_stats_kernel, ignore_index=ignore_index),
        out_shape=(jax.ShapeDtypeStruct((b, 1, hw), jnp.float32),
                   jax.ShapeDtypeStruct((b, 1, hw), jnp.float32)),
        grid=(b, n_tiles),
        in_specs=[
            pl.BlockSpec((1, c, tile_n), lambda bi, ni: (bi, 0, ni)),
            pl.BlockSpec((1, 1, tile_n), lambda bi, ni: (bi, 0, ni)),
        ],
        out_specs=(
            pl.BlockSpec((1, 1, tile_n), lambda bi, ni: (bi, 0, ni)),
            pl.BlockSpec((1, 1, tile_n), lambda bi, ni: (bi, 0, ni)),
        ),
        compiler_params=pltpu.CompilerParams(
            dimension_semantics=("parallel", "parallel")),
    )(logits, target3)

    # ---- OHEM threshold selection (XLA glue) ---------------------------------
    # top_k consumes the negated-prob stream directly (no slice, no negation).
    # k-th smallest prob < 1.5 is exactly torch's "num_valid >= min_kept" case,
    # and its value equals torch's sorted mask_prob[min_kept - 1] there.
    neg_flat = neg_prob.reshape(-1)                      # contiguous, no copy
    if min_kept <= 0:
        # torch: threshold stays self.thresh (min_kept>0 branch skipped)
        thr_eff = jnp.float32(thresh)
    elif min_kept > n_real:
        # torch: min_kept > num_valid always -> keep all valid pixels
        thr_eff = jnp.float32(_KEEP_ALL_THRESHOLD)
    else:
        k = int(min_kept)
        topk, _ = lax.top_k(neg_flat, k)                 # k smallest probs (negated)
        kth = -topk[k - 1]
        use_ohem = kth < jnp.float32(_KEEP_ALL_THRESHOLD)
        thr_eff = jnp.where(use_ohem,
                            jnp.maximum(kth, jnp.float32(thresh)),
                            jnp.float32(_KEEP_ALL_THRESHOLD))
    thr_arr = jnp.reshape(thr_eff, (1,)).astype(jnp.float32)

    # ---- pass 2: tiled masked mean (per-batch accumulators) ------------------
    loss_acc, cnt_acc = pl.pallas_call(
        functools.partial(_ohem_reduce_kernel, hw=hw, tile_n=tile_n2),
        out_shape=(jax.ShapeDtypeStruct((b, 1, 128), jnp.float32),
                   jax.ShapeDtypeStruct((b, 1, 128), jnp.float32)),
        grid=(b, n_tiles2),
        in_specs=[
            pl.BlockSpec(memory_space=pltpu.MemorySpace.SMEM),
            pl.BlockSpec((1, 1, tile_n2), lambda bi, ni: (bi, 0, ni)),
            pl.BlockSpec((1, 1, tile_n2), lambda bi, ni: (bi, 0, ni)),
        ],
        out_specs=(
            pl.BlockSpec((1, 1, 128), lambda bi, ni: (bi, 0, 0)),
            pl.BlockSpec((1, 1, 128), lambda bi, ni: (bi, 0, 0)),
        ),
        compiler_params=pltpu.CompilerParams(
            dimension_semantics=("parallel", "arbitrary")),
    )(thr_arr, neg_prob, nll)

    # every lane of row bi holds the same per-batch total -> take lane 0.
    loss_sum = jnp.sum(loss_acc[:, 0, 0])
    kept_cnt = jnp.sum(cnt_acc[:, 0, 0])
    # NaN when nothing is kept (all pixels ignored) — matches torch.
    return loss_sum / kept_cnt


# ---------------------------- pure-JAX reference -----------------------------
def _reference(pred, target, ignore_index, thresh, min_kept):
    b, c, h, w = pred.shape
    tgt = target.reshape(-1)
    valid = tgt != ignore_index
    num_valid = jnp.sum(valid)
    logits = jnp.transpose(pred, (1, 0, 2, 3)).reshape(c, -1)
    prob = jax.nn.softmax(logits, axis=0)
    prob = jnp.where(valid[None, :], prob, 1.0)
    tgt_c = jnp.where(valid, tgt, 0)
    idx = jnp.arange(tgt.shape[0])
    mp = prob[tgt_c, idx]
    sorted_mp = jnp.sort(mp)
    kth = sorted_mp[min(tgt.shape[0], min_kept) - 1]
    threshold = jnp.where(kth > thresh, kth, jnp.float32(thresh))
    kept = mp <= threshold
    use_ohem = jnp.logical_and(num_valid >= min_kept, num_valid > 0)
    final_valid = jnp.where(use_ohem, jnp.logical_and(valid, kept), valid)
    nll = -jax.nn.log_softmax(logits, axis=0)[tgt_c, idx]
    fv = final_valid.astype(jnp.float32)
    return jnp.sum(nll * fv) / jnp.sum(fv)


if __name__ == "__main__":
    key = jax.random.PRNGKey(0)
    k1, k2, k3 = jax.random.split(key, 3)
    b, c, h, w = 2, 4, 16, 16  # N = b*h*w = 512 >= min_kept = 256
    pred = jax.random.normal(k1, (b, c, h, w), dtype=jnp.float32) * 2.0
    target = jax.random.randint(k2, (b, h, w), 0, c, dtype=jnp.int32)
    ignore_mask = jax.random.uniform(k3, (b, h, w)) < 0.05
    target = jnp.where(ignore_mask, jnp.int32(IGNORE_INDEX), target)

    loss = jax.jit(ohem_cross_entropy_2d)(pred, target)
    loss = jax.block_until_ready(loss)

    ref = _reference(pred, target, IGNORE_INDEX, THRESH, MIN_KEPT)
    assert jnp.allclose(loss, ref, rtol=1e-5, atol=1e-5), (float(loss), float(ref))
    print("KERNEL_OK")
</pallas_src>

<mosaic_0001>
module attributes {stable_mosaic.version = 11 : i64} {
  func.func @_pixel_stats_kernel(%arg0: i32, %arg1: i32, %arg2: memref<1x4x256xf32, #tpu.memory_space<vmem>>, %arg3: memref<1x1x256xi32, #tpu.memory_space<vmem>>, %arg4: memref<1x1x256xf32, #tpu.memory_space<vmem>>, %arg5: memref<1x1x256xf32, #tpu.memory_space<vmem>>) attributes {dimension_semantics = [#tpu.dimension_semantics<parallel>, #tpu.dimension_semantics<parallel>], iteration_bounds = array<i64: 2, 1>, scalar_prefetch = 0 : i64, scratch_operands = 0 : i64, tpu.core_type = #tpu.core_type<tc>, window_params = [{transform_indices = @transform_0, window_bounds = array<i64: 1, 4, 256>}, {transform_indices = @transform_1, window_bounds = array<i64: 1, 1, 256>}, {transform_indices = @transform_2, window_bounds = array<i64: 1, 1, 256>}, {transform_indices = @transform_3, window_bounds = array<i64: 1, 1, 256>}]} {
    %c0 = arith.constant 0 : index
    %c0_0 = arith.constant 0 : index
    %c0_1 = arith.constant 0 : index
    %0 = vector.load %arg2[%c0, %c0_0, %c0_1] : memref<1x4x256xf32, #tpu.memory_space<vmem>>, vector<1x4x256xf32>
    %c0_2 = arith.constant 0 : index
    %c0_3 = arith.constant 0 : index
    %c0_4 = arith.constant 0 : index
    %1 = vector.load %arg3[%c0_2, %c0_3, %c0_4] : memref<1x1x256xi32, #tpu.memory_space<vmem>>, vector<1x1x256xi32>
    %c255_i32 = arith.constant 255 : i32
    %2 = vector.broadcast %c255_i32 : i32 to vector<1x1x256xi32>
    %3 = arith.cmpi ne, %1, %2 : vector<1x1x256xi32>
    %c0_i32 = arith.constant 0 : i32
    %4 = vector.broadcast %c0_i32 : i32 to vector<1x1x256xi32>
    %5 = arith.select %3, %1, %4 : vector<1x1x256xi1>, vector<1x1x256xi32>
    %cst = arith.constant dense<0xFF800000> : vector<1x256xf32>
    %6 = vector.multi_reduction <maximumf>, %0, %cst [1] : vector<1x4x256xf32> to vector<1x256xf32>
    %7 = vector.shape_cast %6 : vector<1x256xf32> to vector<1x1x256xf32>
    %8 = vector.broadcast %7 : vector<1x1x256xf32> to vector<1x4x256xf32>
    %9 = arith.subf %0, %8 : vector<1x4x256xf32>
    %10 = math.exp %9 : vector<1x4x256xf32>
    %cst_5 = arith.constant dense<0.000000e+00> : vector<1x256xf32>
    %11 = vector.multi_reduction <add>, %10, %cst_5 [1] : vector<1x4x256xf32> to vector<1x256xf32>
    %12 = vector.shape_cast %11 : vector<1x256xf32> to vector<1x1x256xf32>
    %13 = tpu.iota {dimensions = array<i32: 1>} : vector<1x4x256xi32>
    %14 = vector.broadcast %5 : vector<1x1x256xi32> to vector<1x4x256xi32>
    %15 = arith.cmpi eq, %13, %14 : vector<1x4x256xi32>
    %cst_6 = arith.constant 0.000000e+00 : f32
    %16 = vector.broadcast %cst_6 : f32 to vector<1x4x256xf32>
    %17 = arith.select %15, %0, %16 : vector<1x4x256xi1>, vector<1x4x256xf32>
    %cst_7 = arith.constant dense<0.000000e+00> : vector<1x256xf32>
    %18 = vector.multi_reduction <add>, %17, %cst_7 [1] : vector<1x4x256xf32> to vector<1x256xf32>
    %19 = vector.shape_cast %18 : vector<1x256xf32> to vector<1x1x256xf32>
    %20 = math.log %12 : vector<1x1x256xf32>
    %21 = arith.addf %20, %7 : vector<1x1x256xf32>
    %22 = arith.subf %21, %19 : vector<1x1x256xf32>
    %23 = arith.subf %19, %7 : vector<1x1x256xf32>
    %24 = math.exp %23 : vector<1x1x256xf32>
    %25 = arith.divf %24, %12 : vector<1x1x256xf32>
    %c0_8 = arith.constant 0 : index
    %c0_9 = arith.constant 0 : index
    %c0_10 = arith.constant 0 : index
    %26 = vector.load %arg4[%c0_8, %c0_9, %c0_10] : memref<1x1x256xf32, #tpu.memory_space<vmem>>, vector<1x1x256xf32>
    tpu.vector_store %arg4[%c0_8, %c0_9, %c0_10], %22 {strides = array<i32>} : memref<1x1x256xf32, #tpu.memory_space<vmem>>, vector<1x1x256xf32>,
    %cst_11 = arith.constant 0.000000e+00 : f32
    %27 = vector.broadcast %cst_11 : f32 to vector<1x1x256xf32>
    %28 = arith.subf %27, %25 : vector<1x1x256xf32>
    %cst_12 = arith.constant -2.000000e+00 : f32
    %29 = vector.broadcast %cst_12 : f32 to vector<1x1x256xf32>
    %30 = arith.select %3, %28, %29 : vector<1x1x256xi1>, vector<1x1x256xf32>
    %c0_13 = arith.constant 0 : index
    %c0_14 = arith.constant 0 : index
    %c0_15 = arith.constant 0 : index
    %31 = vector.load %arg5[%c0_13, %c0_14, %c0_15] : memref<1x1x256xf32, #tpu.memory_space<vmem>>, vector<1x1x256xf32>
    tpu.vector_store %arg5[%c0_13, %c0_14, %c0_15], %30 {strides = array<i32>} : memref<1x1x256xf32, #tpu.memory_space<vmem>>, vector<1x1x256xf32>,
    return
  }
  func.func @transform_0(%arg0: i32, %arg1: i32) -> (i32, i32, i32) {
    %c0_i32 = arith.constant 0 : i32
    %c0_i32_0 = arith.constant 0 : i32
    return %arg0, %c0_i32, %arg1 : i32, i32, i32
  }
  func.func @transform_1(%arg0: i32, %arg1: i32) -> (i32, i32, i32) {
    %c0_i32 = arith.constant 0 : i32
    %c0_i32_0 = arith.constant 0 : i32
    return %arg0, %c0_i32, %arg1 : i32, i32, i32
  }
  func.func @transform_2(%arg0: i32, %arg1: i32) -> (i32, i32, i32) {
    %c0_i32 = arith.constant 0 : i32
    %c0_i32_0 = arith.constant 0 : i32
    return %arg0, %c0_i32, %arg1 : i32, i32, i32
  }
  func.func @transform_3(%arg0: i32, %arg1: i32) -> (i32, i32, i32) {
    %c0_i32 = arith.constant 0 : i32
    %c0_i32_0 = arith.constant 0 : i32
    return %arg0, %c0_i32, %arg1 : i32, i32, i32
  }
}

module attributes {stable_mosaic.version = 11 : i64} {
  func.func @_ohem_reduce_kernel(%arg0: i32, %arg1: i32, %arg2: memref<1xf32, #tpu.memory_space<smem>>, %arg3: memref<1x1x256xf32, #tpu.memory_space<vmem>>, %arg4: memref<1x1x256xf32, #tpu.memory_space<vmem>>, %arg5: memref<1x1x128xf32, #tpu.memory_space<vmem>>, %arg6: memref<1x1x128xf32, #tpu.memory_space<vmem>>) attributes {dimension_semantics = [#tpu.dimension_semantics<parallel>, #tpu.dimension_semantics<arbitrary>], iteration_bounds = array<i64: 2, 1>, scalar_prefetch = 0 : i64, scratch_operands = 0 : i64, tpu.core_type = #tpu.core_type<tc>, window_params = [{transform_indices = @transform_0, window_bounds = array<i64: 1>}, {transform_indices = @transform_1, window_bounds = array<i64: 1, 1, 256>}, {transform_indices = @transform_2, window_bounds = array<i64: 1, 1, 256>}, {transform_indices = @transform_3, window_bounds = array<i64: 1, 1, 128>}, {transform_indices = @transform_4, window_bounds = array<i64: 1, 1, 128>}]} {
    %c0_i32 = arith.constant 0 : i32
    %0 = arith.cmpi eq, %arg1, %c0_i32 : i32
    %1 = arith.extui %0 : i1 to i32
    %c0_i32_0 = arith.constant 0 : i32
    %2 = arith.cmpi ne, %1, %c0_i32_0 : i32
    scf.if %2 {
      %cst_23 = arith.constant 0.000000e+00 : f32
      %36 = vector.broadcast %cst_23 : f32 to vector<1x1x128xf32>
      %c0_24 = arith.constant 0 : index
      %c0_25 = arith.constant 0 : index
      %c0_26 = arith.constant 0 : index
      %37 = vector.load %arg5[%c0_24, %c0_25, %c0_26] : memref<1x1x128xf32, #tpu.memory_space<vmem>>, vector<1x1x128xf32>
      tpu.vector_store %arg5[%c0_24, %c0_25, %c0_26], %36 {strides = array<i32>} : memref<1x1x128xf32, #tpu.memory_space<vmem>>, vector<1x1x128xf32>,
      %cst_27 = arith.constant 0.000000e+00 : f32
      %38 = vector.broadcast %cst_27 : f32 to vector<1x1x128xf32>
      %c0_28 = arith.constant 0 : index
      %c0_29 = arith.constant 0 : index
      %c0_30 = arith.constant 0 : index
      %39 = vector.load %arg6[%c0_28, %c0_29, %c0_30] : memref<1x1x128xf32, #tpu.memory_space<vmem>>, vector<1x1x128xf32>
      tpu.vector_store %arg6[%c0_28, %c0_29, %c0_30], %38 {strides = array<i32>} : memref<1x1x128xf32, #tpu.memory_space<vmem>>, vector<1x1x128xf32>,
    } else {
    }
    %c0 = arith.constant 0 : index
    %3 = memref.load %arg2[%c0] : memref<1xf32, #tpu.memory_space<smem>>
    %cst = arith.constant 0.000000e+00 : f32
    %4 = arith.subf %cst, %3 : f32
    %c0_1 = arith.constant 0 : index
    %c0_2 = arith.constant 0 : index
    %c0_3 = arith.constant 0 : index
    %5 = vector.load %arg3[%c0_1, %c0_2, %c0_3] : memref<1x1x256xf32, #tpu.memory_space<vmem>>, vector<1x1x256xf32>
    %c0_4 = arith.constant 0 : index
    %c0_5 = arith.constant 0 : index
    %c0_6 = arith.constant 0 : index
    %6 = vector.load %arg4[%c0_4, %c0_5, %c0_6] : memref<1x1x256xf32, #tpu.memory_space<vmem>>, vector<1x1x256xf32>
    %7 = tpu.iota {dimensions = array<i32: 2>} : vector<1x1x256xi32>
    %c256_i32 = arith.constant 256 : i32
    %8 = arith.muli %arg1, %c256_i32 : i32
    %9 = vector.broadcast %8 : i32 to vector<1x1x256xi32>
    %10 = arith.addi %9, %7 : vector<1x1x256xi32>
    %c256_i32_7 = arith.constant 256 : i32
    %11 = vector.broadcast %c256_i32_7 : i32 to vector<1x1x256xi32>
    %12 = arith.cmpi slt, %10, %11 : vector<1x1x256xi32>
    %13 = vector.broadcast %4 : f32 to vector<1x1x256xf32>
    %14 = arith.cmpf oge, %5, %13 : vector<1x1x256xf32>
    %15 = arith.andi %12, %14 : vector<1x1x256xi1>
    %c0_8 = arith.constant 0 : index
    %c0_9 = arith.constant 0 : index
    %c0_10 = arith.constant 0 : index
    %16 = vector.load %arg5[%c0_8, %c0_9, %c0_10] : memref<1x1x128xf32, #tpu.memory_space<vmem>>, vector<1x1x128xf32>
    %cst_11 = arith.constant 0.000000e+00 : f32
    %17 = vector.broadcast %cst_11 : f32 to vector<1x1x256xf32>
    %18 = arith.select %15, %6, %17 : vector<1x1x256xi1>, vector<1x1x256xf32>
    %19 = vector.shape_cast %18 : vector<1x1x256xf32> to vector<1x1x1x256xf32>
    %cst_12 = arith.constant dense<0.000000e+00> : vector<1xf32>
    %20 = vector.multi_reduction <add>, %19, %cst_12 [1, 2, 3] : vector<1x1x1x256xf32> to vector<1xf32>
    %21 = vector.shape_cast %20 : vector<1xf32> to vector<1x1x1x1xf32>
    %22 = vector.extract %21[0, 0, 0, 0] : f32 from vector<1x1x1x1xf32>
    %23 = vector.broadcast %22 : f32 to vector<1x1x128xf32>
    %24 = arith.addf %16, %23 : vector<1x1x128xf32>
    %c0_13 = arith.constant 0 : index
    %c0_14 = arith.constant 0 : index
    %c0_15 = arith.constant 0 : index
    %25 = vector.load %arg5[%c0_13, %c0_14, %c0_15] : memref<1x1x128xf32, #tpu.memory_space<vmem>>, vector<1x1x128xf32>
    tpu.vector_store %arg5[%c0_13, %c0_14, %c0_15], %24 {strides = array<i32>} : memref<1x1x128xf32, #tpu.memory_space<vmem>>, vector<1x1x128xf32>,
    %c0_16 = arith.constant 0 : index
    %c0_17 = arith.constant 0 : index
    %c0_18 = arith.constant 0 : index
    %26 = vector.load %arg6[%c0_16, %c0_17, %c0_18] : memref<1x1x128xf32, #tpu.memory_space<vmem>>, vector<1x1x128xf32>
    %27 = arith.extui %15 : vector<1x1x256xi1> to vector<1x1x256xi32>
    %28 = arith.sitofp %27 : vector<1x1x256xi32> to vector<1x1x256xf32>
    %29 = vector.shape_cast %28 : vector<1x1x256xf32> to vector<1x1x1x256xf32>
    %cst_19 = arith.constant dense<0.000000e+00> : vector<1xf32>
    %30 = vector.multi_reduction <add>, %29, %cst_19 [1, 2, 3] : vector<1x1x1x256xf32> to vector<1xf32>
    %31 = vector.shape_cast %30 : vector<1xf32> to vector<1x1x1x1xf32>
    %32 = vector.extract %31[0, 0, 0, 0] : f32 from vector<1x1x1x1xf32>
    %33 = vector.broadcast %32 : f32 to vector<1x1x128xf32>
    %34 = arith.addf %26, %33 : vector<1x1x128xf32>
    %c0_20 = arith.constant 0 : index
    %c0_21 = arith.constant 0 : index
    %c0_22 = arith.constant 0 : index
    %35 = vector.load %arg6[%c0_20, %c0_21, %c0_22] : memref<1x1x128xf32, #tpu.memory_space<vmem>>, vector<1x1x128xf32>
    tpu.vector_store %arg6[%c0_20, %c0_21, %c0_22], %34 {strides = array<i32>} : memref<1x1x128xf32, #tpu.memory_space<vmem>>, vector<1x1x128xf32>,
    return
  }
  func.func @transform_0(%arg0: i32, %arg1: i32) -> i32 {
    %c0_i32 = arith.constant 0 : i32
    %c0_i32_0 = arith.constant 0 : i32
    return %c0_i32 : i32
  }
  func.func @transform_1(%arg0: i32, %arg1: i32) -> (i32, i32, i32) {
    %c0_i32 = arith.constant 0 : i32
    %c0_i32_0 = arith.constant 0 : i32
    return %arg0, %c0_i32, %arg1 : i32, i32, i32
  }
  func.func @transform_2(%arg0: i32, %arg1: i32) -> (i32, i32, i32) {
    %c0_i32 = arith.constant 0 : i32
    %c0_i32_0 = arith.constant 0 : i32
    return %arg0, %c0_i32, %arg1 : i32, i32, i32
  }
  func.func @transform_3(%arg0: i32, %arg1: i32) -> (i32, i32, i32) {
    %c0_i32 = arith.constant 0 : i32
    %c0_i32_0 = arith.constant 0 : i32
    %c0_i32_1 = arith.constant 0 : i32
    return %arg0, %c0_i32, %c0_i32_0 : i32, i32, i32
  }
  func.func @transform_4(%arg0: i32, %arg1: i32) -> (i32, i32, i32) {
    %c0_i32 = arith.constant 0 : i32
    %c0_i32_0 = arith.constant 0 : i32
    %c0_i32_1 = arith.constant 0 : i32
    return %arg0, %c0_i32, %c0_i32_0 : i32, i32, i32
  }
}

</mosaic_0001>

<llo_original>
// kernel: ohem_cross_entropy_2d.2
$region0: #{ohem_cross_entropy_2d.2}
  #allocation0 [shape = 'u32[]', space=smem, size = 0x4, offset = 0x4, fixed_abs, tag = 'smem constant byte address 0x4 - core index']
  #allocation1 [shape = 'u32[144,128]{1,0:T(1,128)}', space=vmem, size = 0x12000, scoped, tag = 'internal scratch']
  %s0 = inlined_call_operand.vmem [shape: f32[2,4,256], index: 0, kind: input, shape index: {}]
  %s1 = inlined_call_operand.vmem [shape: s32[2,1,256], index: 1, kind: input, shape index: {}]
  %s2 = inlined_call_operand.vmem [shape: f32[2,1,256], index: 2, kind: output, shape index: {0}]
  %s3 = inlined_call_operand.vmem [shape: f32[2,1,256], index: 3, kind: output, shape index: {1}]
  %4 = xla_tuple %s2, %s3
  %s5 = sld [smem:[#allocation0]]
  $region49: #{ohem_cross_entropy_2d.2} parent=0
    _
  %s7 = ssub.s32 1, %s5
  %s8 = scalar_select 0, %s7, %s5
  loop: start=0, step=1, limit=4
  $region2: #{ohem_cross_entropy_2d.2} parent=0 // loop_pre_header
    _
  $region3: #{ohem_cross_entropy_2d.2} parent=0 // loop_header
    %s10 = sphi 0, %s14
    %p11 = scmp.ge.s32.totalorder %s10, 4
    %s17 = sphi 0, %s29
    %s18 = sphi 0, %s25
    %s19 = sphi 0, %s17
    %s20 = sphi 0, %s18
    %s21 = sphi 0, %s19
    %s22 = sphi 0, %s20
    %s34 = sphi 0, %s36
    %s37 = sphi 0, %s34
    %s38 = sphi 0, %s37
    %s54 = sphi 0, %s38
    %s62 = sphi 0, %s64
    %s65 = sphi 0, %s62
    %s66 = sphi 0, %s65
    %s82 = sphi 0, %s66
    %s90 = sphi 0, %s92
    %s93 = sphi 0, %s90
    %s94 = sphi 0, %s93
    %s110 = sphi 0, %s94
    %s118 = sphi 0, %s120
    %s121 = sphi 0, %s118
    %s122 = sphi 0, %s121
    %s138 = sphi 0, %s122
  $region4: #{ohem_cross_entropy_2d.2} parent=0 // loop_header_branch
    %13 = sbr.rel (%p11) target = $region8
  $region5: #{ohem_cross_entropy_2d.2} parent=0 // loop_body
    %s15 = ssub.s32 %s10, 1
    %s16 = ssub.s32 %s10, 2
    %s23 = sadd.s32 1, %s18
    %p24 = scmp.ge.s32.totalorder %s23, 1
    %s25 = scalar_select %p24, 0, %s23
    %s26 = sadd.s32 1, %s17
    %s27 = scalar_select %p24, %s26, %s17
    %p28 = scmp.ge.s32.totalorder %s27, 2
    %s29 = scalar_select %p28, 0, %s27
    %s30 = ssub.s32 %s17, %s29
    %s31 = ssub.s32 %s18, %s25
    %s32 = sor.u32 %s30, %s31
    %p33 = scmp.eq.s32.totalorder %s32, 0
    %s35 = sadd.s32 %s34, 1
    %s36 = scalar_select %p33, %s34, %s35
    %p39 = pneg %p33
    %p40 = scmp.eq.s32.totalorder %s10, 1
    %p41 = por %p39, %p40
    %p42 = scmp.ne.s32.totalorder %s34, %s37
    %p43 = scmp.eq.s32.totalorder %s10, 0
    %p44 = por %p42, %p43
    %p45 = scmp.ne.s32.totalorder %s34, %s37
    %p46 = scmp.eq.s32.totalorder %s15, 1
    %p47 = por %p45, %p46
    %p48 = scmp.ne.s32.totalorder %s37, %s38
    %p49 = scmp.eq.s32.totalorder %s15, 0
    %p50 = por %p48, %p49
    %p51 = scmp.ne.s32.totalorder %s37, %s38
    %p52 = scmp.eq.s32.totalorder %s16, 1
    %p53 = por %p51, %p52
    %p55 = scmp.ne.s32.totalorder %s38, %s54
    %p56 = scmp.eq.s32.totalorder %s16, 0
    %p57 = por %p55, %p56
    %s58 = ssub.s32 %s17, %s29
    %s59 = ssub.s32 %s18, %s25
    %s60 = sor.u32 %s58, %s59
    %p61 = scmp.eq.s32.totalorder %s60, 0
    %s63 = sadd.s32 %s62, 1
    %s64 = scalar_select %p61, %s62, %s63
    %p67 = pneg %p61
    %p68 = scmp.eq.s32.totalorder %s10, 1
    %p69 = por %p67, %p68
    %p70 = scmp.ne.s32.totalorder %s62, %s65
    %p71 = scmp.eq.s32.totalorder %s10, 0
    %p72 = por %p70, %p71
    %p73 = scmp.ne.s32.totalorder %s62, %s65
    %p74 = scmp.eq.s32.totalorder %s15, 1
    %p75 = por %p73, %p74
    %p76 = scmp.ne.s32.totalorder %s65, %s66
    %p77 = scmp.eq.s32.totalorder %s15, 0
    %p78 = por %p76, %p77
    %p79 = scmp.ne.s32.totalorder %s65, %s66
    %p80 = scmp.eq.s32.totalorder %s16, 1
    %p81 = por %p79, %p80
    %p83 = scmp.ne.s32.totalorder %s66, %s82
    %p84 = scmp.eq.s32.totalorder %s16, 0
    %p85 = por %p83, %p84
    %s86 = ssub.s32 %s17, %s29
    %s87 = ssub.s32 %s18, %s25
    %s88 = sor.u32 %s86, %s87
    %p89 = scmp.eq.s32.totalorder %s88, 0
    %s91 = sadd.s32 %s90, 1
    %s92 = scalar_select %p89, %s90, %s91
    %p95 = pneg %p89
    %p96 = scmp.eq.s32.totalorder %s10, 1
    %p97 = por %p95, %p96
    %p98 = scmp.ne.s32.totalorder %s90, %s93
    %p99 = scmp.eq.s32.totalorder %s10, 0
    %p100 = por %p98, %p99
    %p101 = scmp.ne.s32.totalorder %s90, %s93
    %p102 = scmp.eq.s32.totalorder %s15, 1
    %p103 = por %p101, %p102
    %p104 = scmp.ne.s32.totalorder %s93, %s94
    %p105 = scmp.eq.s32.totalorder %s15, 0
    %p106 = por %p104, %p105
    %p107 = scmp.ne.s32.totalorder %s93, %s94
    %p108 = scmp.eq.s32.totalorder %s16, 1
    %p109 = por %p107, %p108
    %p111 = scmp.ne.s32.totalorder %s94, %s110
    %p112 = scmp.eq.s32.totalorder %s16, 0
    %p113 = por %p111, %p112
    %s114 = ssub.s32 %s17, %s29
    %s115 = ssub.s32 %s18, %s25
    %s116 = sor.u32 %s114, %s115
    %p117 = scmp.eq.s32.totalorder %s116, 0
    %s119 = sadd.s32 %s118, 1
    %s120 = scalar_select %p117, %s118, %s119
    %p123 = pneg %p117
    %p124 = scmp.eq.s32.totalorder %s10, 1
    %p125 = por %p123, %p124
    %p126 = scmp.ne.s32.totalorder %s118, %s121
    %p127 = scmp.eq.s32.totalorder %s10, 0
    %p128 = por %p126, %p127
    %p129 = scmp.ne.s32.totalorder %s118, %s121
    %p130 = scmp.eq.s32.totalorder %s15, 1
    %p131 = por %p129, %p130
    %p132 = scmp.ne.s32.totalorder %s121, %s122
    %p133 = scmp.eq.s32.totalorder %s15, 0
    %p134 = por %p132, %p133
    %p135 = scmp.ne.s32.totalorder %s121, %s122
    %p136 = scmp.eq.s32.totalorder %s16, 1
    %p137 = por %p135, %p136
    %p139 = scmp.ne.s32.totalorder %s122, %s138
    %p140 = scmp.eq.s32.totalorder %s16, 0
    %p141 = por %p139, %p140
    %p142 = scmp.le.s32.totalorder 1, %s10
    %p143 = scmp.lt.s32.totalorder %s10, 3
    %p144 = pnand %p142, %p143
    %p145 = pneg %p144
    // Predicated region
    $region9: #{ohem_cross_entropy_2d.2} parent=5 // pred_check
      _
    $region10: #{ohem_cross_entropy_2d.2} parent=5 // pred_check_branch
      %147 = sbr.rel (%p144) target = $region12
    $region11: #{ohem_cross_entropy_2d.2} parent=5 // pred_region
      %s148 = ssub.s32 %s10, 1
    $region12: #{ohem_cross_entropy_2d.2} parent=5 // pred_fallthru
      _
    %p149 = scmp.lt.s32.totalorder %s10, 2
    // Predicated region
    $region13: #{ohem_cross_entropy_2d.2} parent=5 // pred_check
      %p150 = pneg %p149
    $region14: #{ohem_cross_entropy_2d.2} parent=5 // pred_check_branch
      %152 = sbr.rel (%p150) target = $region16
    $region15: #{ohem_cross_entropy_2d.2} parent=5 // pred_region
      // Predicated region
      $region17: #{ohem_cross_entropy_2d.2} parent=15 // pred_check
        %p153 = pneg %p44
      $region18: #{ohem_cross_entropy_2d.2} parent=15 // pred_check_branch
        %155 = sbr.rel (%p153) target = $region20
      $region19: #{ohem_cross_entropy_2d.2} parent=15 // pred_region
        %s156 = smul.u32 2, %s18
        %p157 = scmp.lt.s32.totalorder %s17, 1
        %s158 = scalar_select %p157, %s17, 1
        %p159 = scmp.lt.s32.totalorder %s156, 1
        %s160 = scalar_select %p159, %s156, 1
        %s161 = smul.addr %s158, 2
        %s162 = sadd.s32 %s160, %s161
        %s163 = smul.addr %s162, 4
        %s164 = scalar_lea.vmem %s0, %s163
        %s165 = smul.u32 2, %s18
      $region20: #{ohem_cross_entropy_2d.2} parent=15 // pred_fallthru
        _
      // Predicated region
      $region21: #{ohem_cross_entropy_2d.2} parent=15 // pred_check
        %p166 = pneg %p72
      $region22: #{ohem_cross_entropy_2d.2} parent=15 // pred_check_branch
        %168 = sbr.rel (%p166) target = $region24
      $region23: #{ohem_cross_entropy_2d.2} parent=15 // pred_region
        %s169 = smul.u32 2, %s18
        %p170 = scmp.lt.s32.totalorder %s17, 1
        %s171 = scalar_select %p170, %s17, 1
        %p172 = scmp.lt.s32.totalorder %s169, 1
        %s173 = scalar_select %p172, %s169, 1
        %s174 = smul.addr %s171, 2
        %s175 = sadd.s32 %s173, %s174
        %s176 = scalar_lea.vmem %s1, %s175
        %s177 = smul.u32 2, %s18
      $region24: #{ohem_cross_entropy_2d.2} parent=15 // pred_fallthru
        _
    $region16: #{ohem_cross_entropy_2d.2} parent=5 // pred_fallthru
      _
    %p178 = scmp.le.s32.totalorder 1, %s10
    %p179 = scmp.lt.s32.totalorder %s10, 3
    %p180 = pnand %p178, %p179
    %p181 = pneg %p180
    // Predicated region
    $region25: #{ohem_cross_entropy_2d.2} parent=5 // pred_check
      _
    $region26: #{ohem_cross_entropy_2d.2} parent=5 // pred_check_branch
      %183 = sbr.rel (%p180) target = $region28
    $region27: #{ohem_cross_entropy_2d.2} parent=5 // pred_region
      %s184 = ssub.s32 %s10, 1
      %s185 = smul.u32 2, %s20
      %p186 = scmp.lt.s32.totalorder %s19, 1
      %s187 = scalar_select %p186, %s19, 1
      %p188 = scmp.lt.s32.totalorder %s185, 1
      %s189 = scalar_select %p188, %s185, 1
      %s190 = smul.addr %s187, 2
      %s191 = sadd.s32 %s189, %s190
      %s192 = smul.addr %s191, 4
      %s193 = scalar_lea.vmem %s0, %s192
      %p194 = pneg %p50
      %p195 = pneg %p47
      %s196 = smul.u32 2, %s20
      %p197 = scmp.lt.s32.totalorder %s19, 1
      %s198 = scalar_select %p197, %s19, 1
      %p199 = scmp.lt.s32.totalorder %s196, 1
      %s200 = scalar_select %p199, %s196, 1
      %s201 = smul.addr %s198, 2
      %s202 = sadd.s32 %s200, %s201
      %s203 = scalar_lea.vmem %s1, %s202
      %p204 = pneg %p78
      %p205 = pneg %p75
      %p206 = pneg %p106
      %p207 = pneg %p103
      %s208 = smul.u32 2, %s20
      %p209 = scmp.lt.s32.totalorder %s19, 1
      %s210 = scalar_select %p209, %s19, 1
      %p211 = scmp.lt.s32.totalorder %s208, 1
      %s212 = scalar_select %p211, %s208, 1
      %s213 = smul.addr %s210, 2
      %s214 = sadd.s32 %s212, %s213
      %s215 = scalar_lea.vmem %s2, %s214
      %p216 = pneg %p134
      %p217 = pneg %p131
      %s218 = smul.u32 2, %s20
      %p219 = scmp.lt.s32.totalorder %s19, 1
      %s220 = scalar_select %p219, %s19, 1
      %p221 = scmp.lt.s32.totalorder %s218, 1
      %s222 = scalar_select %p221, %s218, 1
      %s223 = smul.addr %s220, 2
      %s224 = sadd.s32 %s222, %s223
      %s225 = scalar_lea.vmem %s3, %s224
      %s226 = smul.u32 2, %s20
      %p227 = scmp.lt.s32.totalorder %s19, 1
      %s228 = scalar_select %p227, %s19, 1
      %p229 = scmp.lt.s32.totalorder %s226, 1
      %s230 = scalar_select %p229, %s226, 1
      %s231 = smul.addr %s228, 2
      %s232 = sadd.s32 %s230, %s231
      %s233 = smul.addr %s232, 4
      %s234 = scalar_lea.vmem %s0, %s233
      %s235 = smul.u32 2, %s20
      %s236 = smul.u32 2, %s20
      %p237 = scmp.lt.s32.totalorder %s19, 1
      %s238 = scalar_select %p237, %s19, 1
      %p239 = scmp.lt.s32.totalorder %s236, 1
      %s240 = scalar_select %p239, %s236, 1
      %s241 = smul.addr %s238, 2
      %s242 = sadd.s32 %s240, %s241
      %s243 = scalar_lea.vmem %s1, %s242
      %s244 = smul.u32 2, %s20
      %s245 = smul.u32 2, %s20
      %p246 = scmp.lt.s32.totalorder %s19, 1
      %s247 = scalar_select %p246, %s19, 1
      %p248 = scmp.lt.s32.totalorder %s245, 1
      %s249 = scalar_select %p248, %s245, 1
      %s250 = smul.addr %s247, 2
      %s251 = sadd.s32 %s249, %s250
      %s252 = scalar_lea.vmem %s2, %s251
      %s253 = smul.u32 2, %s20
      %s254 = smul.u32 2, %s20
      %p255 = scmp.lt.s32.totalorder %s19, 1
      %s256 = scalar_select %p255, %s19, 1
      %p257 = scmp.lt.s32.totalorder %s254, 1
      %s258 = scalar_select %p257, %s254, 1
      %s259 = smul.addr %s256, 2
      %s260 = sadd.s32 %s258, %s259
      %s261 = scalar_lea.vmem %s3, %s260
      %s262 = smul.u32 2, %s20
      %v263 = vld [vmem:[%s234] sm:$0xff]
      %v264 = vld [vmem:[%s243] sm:$0x3]
      %vm265 = vcmp.ne.s32.totalorder %v264, 255
      %v266 = vsel %vm265, %v264, 0
      %v268 = vcombine.high %v263, %v263
      %vm270 = vcmask 1043456
      %v271 = vsel %vm270, %v263, -inf
      %v272 = vrot.slane %v271, 4
      %v273 = vmax.f32 %v271, %v272
      %v274 = vrot.slane %v273, 2
      %v275 = vmax.f32 %v273, %v274
      %v276 = vrot.slane %v275, 1
      %v277 = vmax.f32 %v275, %v276
      %v278 = vsel %vm270, %v268, -inf
      %v279 = vrot.slane %v278, 4
      %v280 = vmax.f32 %v278, %v279
      %v281 = vrot.slane %v280, 2
      %v282 = vmax.f32 %v280, %v281
      %v283 = vrot.slane %v282, 1
      %v284 = vmax.f32 %v282, %v283
      %v287 = vcombine.low %v277, %v284
      %v289 = vsub.f32 %v263, %v287
      %v290 = vmul.f32 %v289, 1.442695
      %v291 = vpow.pop %v290
      %v293 = vcombine.high %v291, %v291
      %v295 = vsel %vm270, %v291, 0.0
      %v296 = vrot.slane %v295, 4
      %v297 = vadd.f32 %v295, %v296
      %v298 = vrot.slane %v297, 2
      %v299 = vadd.f32 %v297, %v298
      %v300 = vrot.slane %v299, 1
      %v301 = vadd.f32 %v299, %v300
      %v302 = vsel %vm270, %v293, 0.0
      %v303 = vrot.slane %v302, 4
      %v304 = vadd.f32 %v302, %v303
      %v305 = vrot.slane %v304, 2
      %v306 = vadd.f32 %v304, %v305
      %v307 = vrot.slane %v306, 1
      %v308 = vadd.f32 %v306, %v307
      %v309 = vlaneseq
      %v310 = vshrl.u32 %v309, 7
      %v311 = vlaneseq
      %v312 = vshrl.u32 %v311, 7
      %v313 = vsub.s32 0, %v312
      %v314 = vrot.slane %v266, %v313
      %v315 = vlaneseq
      %v316 = vshrl.u32 %v315, 7
      %v317 = vsub.s32 1, %v316
      %v318 = vrot.slane %v266, %v317
      %vm319 = vcmp.eq.s32.totalorder %v310, %v314
      %vm320 = vcmp.eq.s32.totalorder %v310, %v318
      %v321 = vsel %vm319, %v263, 0.0
      %v322 = vsel %vm320, %v268, 0.0
      %v323 = vsel %vm270, %v321, 0.0
      %v324 = vrot.slane %v323, 4
      %v325 = vadd.f32 %v323, %v324
      %v326 = vrot.slane %v325, 2
      %v327 = vadd.f32 %v325, %v326
      %v328 = vrot.slane %v327, 1
      %v329 = vadd.f32 %v327, %v328
      %v330 = vsel %vm270, %v322, 0.0
      %v331 = vrot.slane %v330, 4
      %v332 = vadd.f32 %v330, %v331
      %v333 = vrot.slane %v332, 2
      %v334 = vadd.f32 %v332, %v333
      %v335 = vrot.slane %v334, 1
      %v336 = vadd.f32 %v334, %v335
      %v337 = vlog2.pop %v301
      %v338 = vmul.f32 %v337, 0.6931472
      %v339 = vlog2.pop %v308
      %v340 = vmul.f32 %v339, 0.6931472
      %v341 = vadd.f32 %v338, %v277
      %v342 = vadd.f32 %v340, %v284
      %v343 = vsub.f32 %v341, %v329
      %v344 = vsub.f32 %v342, %v336
      %v345 = vsub.f32 %v329, %v277
      %v346 = vsub.f32 %v336, %v284
      %v347 = vmul.f32 %v345, 1.442695
      %v348 = vpow.pop %v347
      %v349 = vmul.f32 %v346, 1.442695
      %v350 = vpow.pop %v349
      %v351 = vrcp.pop %v301
      %v352 = vmul.f32 %v348, %v351
      %v353 = vrcp.pop %v308
      %v354 = vmul.f32 %v350, %v353
      %v357 = vcombine.low %v343, %v344
      %v359 = vunpack.c.l.s4 1966171168
      %v360 = vunpack.c.0.s8 %v359
      %v361 = vlaneseq
      %v362 = vshrl.u32 %v361, 7
      %v363 = vsub.s32 %v360, %v362
      %v364 = vrot.slane %v357, %v363
      %v366 = vunpack.c.l.s4 1966171168
      %v367 = vunpack.c.0.s8 %v366
      %v368 = vlaneseq
      %v369 = vshrl.u32 %v368, 7
      %v370 = vsub.s32 %v367, %v369
      %v371 = vrot.slane %v364, %v370
      %v373 = vlaneseq
      %vm374 = vcmp.ge.s32.totalorder %v373, 0
      %vm375 = vcmp.lt.s32.totalorder %v373, 256
      %vm376 = vmand %vm374, %vm375
      %377 = vst.msk [vmem:[%s252] sm:$0x3] %vm376, %v371
      %v378 = vsub.f32 0.0, %v352
      %v379 = vsub.f32 0.0, %v354
      %v382 = vcombine.low %v378, %v379
      %v384 = vunpack.c.l.s4 1966171168
      %v385 = vunpack.c.0.s8 %v384
      %v386 = vlaneseq
      %v387 = vshrl.u32 %v386, 7
      %v388 = vsub.s32 %v385, %v387
      %v389 = vrot.slane %v382, %v388
      %v391 = vunpack.c.l.s4 1966171168
      %v392 = vunpack.c.0.s8 %v391
      %v393 = vlaneseq
      %v394 = vshrl.u32 %v393, 7
      %v395 = vsub.s32 %v392, %v394
      %v396 = vrot.slane %v389, %v395
      %v398 = vsel %vm265, %v396, -2.0
      %399 = vst.msk [vmem:[%s261] sm:$0x3] %vm376, %v398
      %s400 = smul.u32 2, %s20
      %p401 = scmp.lt.s32.totalorder %s19, 1
      %s402 = scalar_select %p401, %s19, 1
      %p403 = scmp.lt.s32.totalorder %s400, 1
      %s404 = scalar_select %p403, %s400, 1
      %s405 = smul.addr %s402, 2
      %s406 = sadd.s32 %s404, %s405
      %s407 = scalar_lea.vmem %s2, %s406
      %s408 = smul.u32 2, %s20
      %p409 = scmp.lt.s32.totalorder %s19, 1
      %s410 = scalar_select %p409, %s19, 1
      %p411 = scmp.lt.s32.totalorder %s408, 1
      %s412 = scalar_select %p411, %s408, 1
      %s413 = smul.addr %s410, 2
      %s414 = sadd.s32 %s412, %s413
      %s415 = scalar_lea.vmem %s3, %s414
      // Predicated region
      $region29: #{ohem_cross_entropy_2d.2} parent=27 // pred_check
        %p416 = pneg %p103
      $region30: #{ohem_cross_entropy_2d.2} parent=27 // pred_check_branch
        %418 = sbr.rel (%p416) target = $region32
      $region31: #{ohem_cross_entropy_2d.2} parent=27 // pred_region
        %s419 = smul.u32 2, %s20
      $region32: #{ohem_cross_entropy_2d.2} parent=27 // pred_fallthru
        _
      // Predicated region
      $region33: #{ohem_cross_entropy_2d.2} parent=27 // pred_check
        %p420 = pneg %p131
      $region34: #{ohem_cross_entropy_2d.2} parent=27 // pred_check_branch
        %422 = sbr.rel (%p420) target = $region36
      $region35: #{ohem_cross_entropy_2d.2} parent=27 // pred_region
        %s423 = smul.u32 2, %s20
      $region36: #{ohem_cross_entropy_2d.2} parent=27 // pred_fallthru
        _
    $region28: #{ohem_cross_entropy_2d.2} parent=5 // pred_fallthru
      _
    %p424 = scmp.le.s32.totalorder 2, %s10
    // Predicated region
    $region37: #{ohem_cross_entropy_2d.2} parent=5 // pred_check
      %p425 = pneg %p424
    $region38: #{ohem_cross_entropy_2d.2} parent=5 // pred_check_branch
      %427 = sbr.rel (%p425) target = $region40
    $region39: #{ohem_cross_entropy_2d.2} parent=5 // pred_region
      %s428 = ssub.s32 %s10, 2
      // Predicated region
      $region41: #{ohem_cross_entropy_2d.2} parent=39 // pred_check
        %p429 = pneg %p109
      $region42: #{ohem_cross_entropy_2d.2} parent=39 // pred_check_branch
        %431 = sbr.rel (%p429) target = $region44
      $region43: #{ohem_cross_entropy_2d.2} parent=39 // pred_region
        %s432 = smul.u32 2, %s22
        %p433 = scmp.lt.s32.totalorder %s21, 1
        %s434 = scalar_select %p433, %s21, 1
        %p435 = scmp.lt.s32.totalorder %s432, 1
        %s436 = scalar_select %p435, %s432, 1
        %s437 = smul.addr %s434, 2
        %s438 = sadd.s32 %s436, %s437
        %s439 = scalar_lea.vmem %s2, %s438
      $region44: #{ohem_cross_entropy_2d.2} parent=39 // pred_fallthru
        _
      // Predicated region
      $region45: #{ohem_cross_entropy_2d.2} parent=39 // pred_check
        %p440 = pneg %p137
      $region46: #{ohem_cross_entropy_2d.2} parent=39 // pred_check_branch
        %442 = sbr.rel (%p440) target = $region48
      $region47: #{ohem_cross_entropy_2d.2} parent=39 // pred_region
        %s443 = smul.u32 2, %s22
        %p444 = scmp.lt.s32.totalorder %s21, 1
        %s445 = scalar_select %p444, %s21, 1
        %p446 = scmp.lt.s32.totalorder %s443, 1
        %s447 = scalar_select %p446, %s443, 1
        %s448 = smul.addr %s445, 2
        %s449 = sadd.s32 %s447, %s448
        %s450 = scalar_lea.vmem %s3, %s449
      $region48: #{ohem_cross_entropy_2d.2} parent=39 // pred_fallthru
        _
    $region40: #{ohem_cross_entropy_2d.2} parent=5 // pred_fallthru
      _
  $region6: #{ohem_cross_entropy_2d.2} parent=0 // loop_footer
    %s14 = sadd.s32 1, %s10
  $region7: #{ohem_cross_entropy_2d.2} parent=0 // loop_footer_branch
    %9 = sbr.rel target = $region3
  $region8: #{ohem_cross_entropy_2d.2} parent=0 // loop_exit
    _

// kernel: ohem_cross_entropy_2d.3
$region0: #{ohem_cross_entropy_2d.3}
  #allocation0 [shape = 'u32[]', space=smem, size = 0x4, offset = 0x4, fixed_abs, tag = 'smem constant byte address 0x4 - core index']
  #allocation1 [shape = 'u32[144,128]{1,0:T(1,128)}', space=vmem, size = 0x12000, scoped, tag = 'internal scratch']
  #allocation2 [shape = 'f32[1]{0:T(128)S(6)}', space=smem, size = 0x200, scoped, tag = 'scoped memory for ohem_cross_entropy_2d.3']
  %s0 = inlined_call_operand.<no memory space> [shape: f32[1], index: 0, kind: input, shape index: {}]
  %s1 = inlined_call_operand.vmem [shape: f32[2,1,256], index: 1, kind: input, shape index: {}]
  %s2 = inlined_call_operand.vmem [shape: f32[2,1,256], index: 2, kind: input, shape index: {}]
  %s3 = inlined_call_operand.vmem [shape: f32[2,1,128], index: 3, kind: output, shape index: {0}]
  %s4 = inlined_call_operand.vmem [shape: f32[2,1,128], index: 4, kind: output, shape index: {1}]
  %5 = xla_tuple %s3, %s4
  %s6 = sld [smem:[#allocation0]]
  $region57: #{ohem_cross_entropy_2d.3} parent=0
    _
  %s8 = ssub.s32 1, %s6
  %s9 = scalar_select 0, %s8, %s6
  %10 = sst [smem:[#allocation2]] %s0
  loop: start=0, step=1, limit=4
  $region2: #{ohem_cross_entropy_2d.3} parent=0 // loop_pre_header
    _
  $region3: #{ohem_cross_entropy_2d.3} parent=0 // loop_header
    %s12 = sphi 0, %s16
    %p13 = scmp.ge.s32.totalorder %s12, 4
    %s19 = sphi 0, %s31
    %s20 = sphi 0, %s27
    %s21 = sphi 0, %s19
    %s22 = sphi 0, %s20
    %s23 = sphi 0, %s21
    %s24 = sphi 0, %s22
    %s32 = sphi 0, %s32
    %s34 = sphi 0, %s32
    %s35 = sphi 0, %s34
    %s49 = sphi 0, %s35
    %s57 = sphi 0, %s59
    %s60 = sphi 0, %s57
    %s61 = sphi 0, %s60
    %s77 = sphi 0, %s61
    %s85 = sphi 0, %s87
    %s88 = sphi 0, %s85
    %s89 = sphi 0, %s88
    %s105 = sphi 0, %s89
    %s111 = sphi 0, %s113
    %s114 = sphi 0, %s111
    %s115 = sphi 0, %s114
    %s131 = sphi 0, %s115
    %s137 = sphi 0, %s139
    %s140 = sphi 0, %s137
    %s141 = sphi 0, %s140
    %s157 = sphi 0, %s141
  $region4: #{ohem_cross_entropy_2d.3} parent=0 // loop_header_branch
    %15 = sbr.rel (%p13) target = $region8
  $region5: #{ohem_cross_entropy_2d.3} parent=0 // loop_body
    %s17 = ssub.s32 %s12, 1
    %s18 = ssub.s32 %s12, 2
    %s25 = sadd.s32 1, %s20
    %p26 = scmp.ge.s32.totalorder %s25, 1
    %s27 = scalar_select %p26, 0, %s25
    %s28 = sadd.s32 1, %s19
    %s29 = scalar_select %p26, %s28, %s19
    %p30 = scmp.ge.s32.totalorder %s29, 2
    %s31 = scalar_select %p30, 0, %s29
    %s33 = sadd.s32 %s32, 1
    %p36 = scmp.eq.s32.totalorder %s12, 1
    %p37 = scmp.ne.s32.totalorder %s32, %s34
    %p38 = scmp.eq.s32.totalorder %s12, 0
    %p39 = por %p37, %p38
    %p40 = scmp.ne.s32.totalorder %s32, %s34
    %p41 = scmp.eq.s32.totalorder %s17, 1
    %p42 = por %p40, %p41
    %p43 = scmp.ne.s32.totalorder %s34, %s35
    %p44 = scmp.eq.s32.totalorder %s17, 0
    %p45 = por %p43, %p44
    %p46 = scmp.ne.s32.totalorder %s34, %s35
    %p47 = scmp.eq.s32.totalorder %s18, 1
    %p48 = por %p46, %p47
    %p50 = scmp.ne.s32.totalorder %s35, %s49
    %p51 = scmp.eq.s32.totalorder %s18, 0
    %p52 = por %p50, %p51
    %s53 = ssub.s32 %s19, %s31
    %s54 = ssub.s32 %s20, %s27
    %s55 = sor.u32 %s53, %s54
    %p56 = scmp.eq.s32.totalorder %s55, 0
    %s58 = sadd.s32 %s57, 1
    %s59 = scalar_select %p56, %s57, %s58
    %p62 = pneg %p56
    %p63 = scmp.eq.s32.totalorder %s12, 1
    %p64 = por %p62, %p63
    %p65 = scmp.ne.s32.totalorder %s57, %s60
    %p66 = scmp.eq.s32.totalorder %s12, 0
    %p67 = por %p65, %p66
    %p68 = scmp.ne.s32.totalorder %s57, %s60
    %p69 = scmp.eq.s32.totalorder %s17, 1
    %p70 = por %p68, %p69
    %p71 = scmp.ne.s32.totalorder %s60, %s61
    %p72 = scmp.eq.s32.totalorder %s17, 0
    %p73 = por %p71, %p72
    %p74 = scmp.ne.s32.totalorder %s60, %s61
    %p75 = scmp.eq.s32.totalorder %s18, 1
    %p76 = por %p74, %p75
    %p78 = scmp.ne.s32.totalorder %s61, %s77
    %p79 = scmp.eq.s32.totalorder %s18, 0
    %p80 = por %p78, %p79
    %s81 = ssub.s32 %s19, %s31
    %s82 = ssub.s32 %s20, %s27
    %s83 = sor.u32 %s81, %s82
    %p84 = scmp.eq.s32.totalorder %s83, 0
    %s86 = sadd.s32 %s85, 1
    %s87 = scalar_select %p84, %s85, %s86
    %p90 = pneg %p84
    %p91 = scmp.eq.s32.totalorder %s12, 1
    %p92 = por %p90, %p91
    %p93 = scmp.ne.s32.totalorder %s85, %s88
    %p94 = scmp.eq.s32.totalorder %s12, 0
    %p95 = por %p93, %p94
    %p96 = scmp.ne.s32.totalorder %s85, %s88
    %p97 = scmp.eq.s32.totalorder %s17, 1
    %p98 = por %p96, %p97
    %p99 = scmp.ne.s32.totalorder %s88, %s89
    %p100 = scmp.eq.s32.totalorder %s17, 0
    %p101 = por %p99, %p100
    %p102 = scmp.ne.s32.totalorder %s88, %s89
    %p103 = scmp.eq.s32.totalorder %s18, 1
    %p104 = por %p102, %p103
    %p106 = scmp.ne.s32.totalorder %s89, %s105
    %p107 = scmp.eq.s32.totalorder %s18, 0
    %p108 = por %p106, %p107
    %s109 = ssub.s32 %s19, %s31
    %p110 = scmp.eq.s32.totalorder %s109, 0
    %s112 = sadd.s32 %s111, 1
    %s113 = scalar_select %p110, %s111, %s112
    %p116 = pneg %p110
    %p117 = scmp.eq.s32.totalorder %s12, 1
    %p118 = por %p116, %p117
    %p119 = scmp.ne.s32.totalorder %s111, %s114
    %p120 = scmp.eq.s32.totalorder %s12, 0
    %p121 = por %p119, %p120
    %p122 = scmp.ne.s32.totalorder %s111, %s114
    %p123 = scmp.eq.s32.totalorder %s17, 1
    %p124 = por %p122, %p123
    %p125 = scmp.ne.s32.totalorder %s114, %s115
    %p126 = scmp.eq.s32.totalorder %s17, 0
    %p127 = por %p125, %p126
    %p128 = scmp.ne.s32.totalorder %s114, %s115
    %p129 = scmp.eq.s32.totalorder %s18, 1
    %p130 = por %p128, %p129
    %p132 = scmp.ne.s32.totalorder %s115, %s131
    %p133 = scmp.eq.s32.totalorder %s18, 0
    %p134 = por %p132, %p133
    %s135 = ssub.s32 %s19, %s31
    %p136 = scmp.eq.s32.totalorder %s135, 0
    %s138 = sadd.s32 %s137, 1
    %s139 = scalar_select %p136, %s137, %s138
    %p142 = pneg %p136
    %p143 = scmp.eq.s32.totalorder %s12, 1
    %p144 = por %p142, %p143
    %p145 = scmp.ne.s32.totalorder %s137, %s140
    %p146 = scmp.eq.s32.totalorder %s12, 0
    %p147 = por %p145, %p146
    %p148 = scmp.ne.s32.totalorder %s137, %s140
    %p149 = scmp.eq.s32.totalorder %s17, 1
    %p150 = por %p148, %p149
    %p151 = scmp.ne.s32.totalorder %s140, %s141
    %p152 = scmp.eq.s32.totalorder %s17, 0
    %p153 = por %p151, %p152
    %p154 = scmp.ne.s32.totalorder %s140, %s141
    %p155 = scmp.eq.s32.totalorder %s18, 1
    %p156 = por %p154, %p155
    %p158 = scmp.ne.s32.totalorder %s141, %s157
    %p159 = scmp.eq.s32.totalorder %s18, 0
    %p160 = por %p158, %p159
    %p161 = scmp.le.s32.totalorder 1, %s12
    %p162 = scmp.lt.s32.totalorder %s12, 3
    %p163 = pnand %p161, %p162
    %p164 = pneg %p163
    // Predicated region
    $region9: #{ohem_cross_entropy_2d.3} parent=5 // pred_check
      _
    $region10: #{ohem_cross_entropy_2d.3} parent=5 // pred_check_branch
      %166 = sbr.rel (%p163) target = $region12
    $region11: #{ohem_cross_entropy_2d.3} parent=5 // pred_region
      %s167 = ssub.s32 %s12, 1
      // Predicated region
      $region13: #{ohem_cross_entropy_2d.3} parent=11 // pred_check
        %p168 = pneg %p45
      $region14: #{ohem_cross_entropy_2d.3} parent=11 // pred_check_branch
        %170 = sbr.rel (%p168) target = $region16
      $region15: #{ohem_cross_entropy_2d.3} parent=11 // pred_region
        _
      $region16: #{ohem_cross_entropy_2d.3} parent=11 // pred_fallthru
        _
    $region12: #{ohem_cross_entropy_2d.3} parent=5 // pred_fallthru
      _
    %p171 = scmp.lt.s32.totalorder %s12, 2
    // Predicated region
    $region17: #{ohem_cross_entropy_2d.3} parent=5 // pred_check
      %p172 = pneg %p171
    $region18: #{ohem_cross_entropy_2d.3} parent=5 // pred_check_branch
      %174 = sbr.rel (%p172) target = $region20
    $region19: #{ohem_cross_entropy_2d.3} parent=5 // pred_region
      // Predicated region
      $region21: #{ohem_cross_entropy_2d.3} parent=19 // pred_check
        %p175 = pneg %p67
      $region22: #{ohem_cross_entropy_2d.3} parent=19 // pred_check_branch
        %177 = sbr.rel (%p175) target = $region24
      $region23: #{ohem_cross_entropy_2d.3} parent=19 // pred_region
        %s178 = smul.u32 2, %s20
        %p179 = scmp.lt.s32.totalorder %s19, 1
        %s180 = scalar_select %p179, %s19, 1
        %p181 = scmp.lt.s32.totalorder %s178, 1
        %s182 = scalar_select %p181, %s178, 1
        %s183 = smul.addr %s180, 2
        %s184 = sadd.s32 %s182, %s183
        %s185 = scalar_lea.vmem %s1, %s184
        %s186 = smul.u32 2, %s20
      $region24: #{ohem_cross_entropy_2d.3} parent=19 // pred_fallthru
        _
      // Predicated region
      $region25: #{ohem_cross_entropy_2d.3} parent=19 // pred_check
        %p187 = pneg %p95
      $region26: #{ohem_cross_entropy_2d.3} parent=19 // pred_check_branch
        %189 = sbr.rel (%p187) target = $region28
      $region27: #{ohem_cross_entropy_2d.3} parent=19 // pred_region
        %s190 = smul.u32 2, %s20
        %p191 = scmp.lt.s32.totalorder %s19, 1
        %s192 = scalar_select %p191, %s19, 1
        %p193 = scmp.lt.s32.totalorder %s190, 1
        %s194 = scalar_select %p193, %s190, 1
        %s195 = smul.addr %s192, 2
        %s196 = sadd.s32 %s194, %s195
        %s197 = scalar_lea.vmem %s2, %s196
        %s198 = smul.u32 2, %s20
      $region28: #{ohem_cross_entropy_2d.3} parent=19 // pred_fallthru
        _
    $region20: #{ohem_cross_entropy_2d.3} parent=5 // pred_fallthru
      _
    %p199 = scmp.le.s32.totalorder 1, %s12
    %p200 = scmp.lt.s32.totalorder %s12, 3
    %p201 = pnand %p199, %p200
    %p202 = pneg %p201
    // Predicated region
    $region29: #{ohem_cross_entropy_2d.3} parent=5 // pred_check
      _
    $region30: #{ohem_cross_entropy_2d.3} parent=5 // pred_check_branch
      %204 = sbr.rel (%p201) target = $region32
    $region31: #{ohem_cross_entropy_2d.3} parent=5 // pred_region
      %s205 = ssub.s32 %s12, 1
      %p206 = pneg %p45
      %p207 = pneg %p42
      %s208 = smul.u32 2, %s22
      %p209 = scmp.lt.s32.totalorder %s21, 1
      %s210 = scalar_select %p209, %s21, 1
      %p211 = scmp.lt.s32.totalorder %s208, 1
      %s212 = scalar_select %p211, %s208, 1
      %s213 = smul.addr %s210, 2
      %s214 = sadd.s32 %s212, %s213
      %s215 = scalar_lea.vmem %s1, %s214
      %p216 = pneg %p73
      %p217 = pneg %p70
      %s218 = smul.u32 2, %s22
      %p219 = scmp.lt.s32.totalorder %s21, 1
      %s220 = scalar_select %p219, %s21, 1
      %p221 = scmp.lt.s32.totalorder %s218, 1
      %s222 = scalar_select %p221, %s218, 1
      %s223 = smul.addr %s220, 2
      %s224 = sadd.s32 %s222, %s223
      %s225 = scalar_lea.vmem %s2, %s224
      %p226 = pneg %p101
      %p227 = pneg %p98
      %p228 = pneg %p127
      %p229 = pneg %p124
      %p230 = scmp.lt.s32.totalorder %s21, 1
      %s231 = scalar_select %p230, %s21, 1
      %s232 = scalar_lea.vmem %s3, %s231
      %p233 = pneg %p153
      %p234 = pneg %p150
      %p235 = scmp.lt.s32.totalorder %s21, 1
      %s236 = scalar_select %p235, %s21, 1
      %s237 = scalar_lea.vmem %s4, %s236
      %s238 = smul.u32 2, %s22
      %p239 = scmp.lt.s32.totalorder %s21, 1
      %s240 = scalar_select %p239, %s21, 1
      %p241 = scmp.lt.s32.totalorder %s238, 1
      %s242 = scalar_select %p241, %s238, 1
      %s243 = smul.addr %s240, 2
      %s244 = sadd.s32 %s242, %s243
      %s245 = scalar_lea.vmem %s1, %s244
      %s246 = smul.u32 2, %s22
      %s247 = smul.u32 2, %s22
      %p248 = scmp.lt.s32.totalorder %s21, 1
      %s249 = scalar_select %p248, %s21, 1
      %p250 = scmp.lt.s32.totalorder %s247, 1
      %s251 = scalar_select %p250, %s247, 1
      %s252 = smul.addr %s249, 2
      %s253 = sadd.s32 %s251, %s252
      %s254 = scalar_lea.vmem %s2, %s253
      %s255 = smul.u32 2, %s22
      %p256 = scmp.lt.s32.totalorder %s21, 1
      %s257 = scalar_select %p256, %s21, 1
      %s258 = scalar_lea.vmem %s3, %s257
      %p259 = scmp.lt.s32.totalorder %s21, 1
      %s260 = scalar_select %p259, %s21, 1
      %s261 = scalar_lea.vmem %s4, %s260
      %p262 = scmp.eq.s32.totalorder %s22, 0
      // Predicated region
      $region33: #{ohem_cross_entropy_2d.3} parent=31 // pred_check
        %p263 = pneg %p262
      $region34: #{ohem_cross_entropy_2d.3} parent=31 // pred_check_branch
        %265 = sbr.rel (%p263) target = $region36
      $region35: #{ohem_cross_entropy_2d.3} parent=31 // pred_region
        %266 = vst [vmem:[%s258] sm:$0x1] 0.0
        %267 = vst [vmem:[%s261] sm:$0x1] 0.0
      $region36: #{ohem_cross_entropy_2d.3} parent=31 // pred_fallthru
        _
      %s268 = sld [smem:[#allocation2]]
      %s269 = ssub.f32 0.0, %s268
      %v270 = vld [vmem:[%s245] sm:$0x3]
      %v271 = vld [vmem:[%s254] sm:$0x3]
      %v272 = vlaneseq
      %v273 = vand.u32 %v272, 127
      %v274 = vadd.s32 %v273, 128
      %s275 = smul.u32 %s22, 256
      %v276 = vstv %s275
      %v277 = vadd.s32 %v276, %v273
      %v278 = vadd.s32 %v276, %v274
      %vm279 = vcmp.lt.s32.totalorder %v277, 256
      %vm280 = vcmp.lt.s32.totalorder %v278, 256
      %v281 = vstv %s269
      %vm282 = vcmp.ge.f32.partialorder %v270, %v281
      %v283 = vsel %vm282, 1, 0
      %v284 = vlaneseq
      %v285 = vshrl.u32 %v284, 7
      %v286 = vsub.s32 0, %v285
      %v287 = vrot.slane %v283, %v286
      %v288 = vlaneseq
      %v289 = vshrl.u32 %v288, 7
      %v290 = vsub.s32 1, %v289
      %v291 = vrot.slane %v283, %v290
      %vm292 = vcmp.ne.s32.totalorder %v287, 0
      %vm293 = vcmp.ne.s32.totalorder %v291, 0
      %vm294 = vmand %vm279, %vm292
      %vm295 = vmand %vm280, %vm293
      %v296 = vld [vmem:[%s258] sm:$0x1]
      %v298 = vlaneseq
      %v299 = vshrl.u32 %v298, 7
      %v300 = vsub.s32 0, %v299
      %v301 = vrot.slane %v271, %v300
      %v302 = vlaneseq
      %v303 = vshrl.u32 %v302, 7
      %v304 = vsub.s32 1, %v303
      %v305 = vrot.slane %v271, %v304
      %v308 = vsel %vm294, %v301, 0.0
      %v309 = vsel %vm295, %v305, 0.0
      %vm310 = vcmask 1040384
      %v311 = vsel %vm310, %v308, 0.0
      %v312 = vsel %vm310, %v309, 0.0
      %v313 = vadd.f32 %v311, %v312
      %314 = vadd.xlane.f32.xlu0 %v313
      %v315 = vpop.xlane.xlu0 %314
      %v316 = vrot.slane %v315, 4
      %v317 = vadd.f32 %v315, %v316
      %v318 = vrot.slane %v317, 2
      %v319 = vadd.f32 %v317, %v318
      %v320 = vrot.slane %v319, 1
      %v321 = vadd.f32 %v319, %v320
      %s322 = vtos %v321
      %v323 = vstv %s322
      %v324 = vadd.f32 %v296, %v323
      %325 = vst [vmem:[%s258] sm:$0x1] %v324
      %v326 = vld [vmem:[%s261] sm:$0x1]
      %v327 = vsel %vm294, 1, 0
      %v328 = vsel %vm295, 1, 0
      %v329 = vcvt.s32.f32 %v327
      %v330 = vcvt.s32.f32 %v328
      %v331 = vsel %vm310, %v329, 0.0
      %v332 = vsel %vm310, %v330, 0.0
      %v333 = vadd.f32 %v331, %v332
      %334 = vadd.xlane.f32.xlu0 %v333
      %v335 = vpop.xlane.xlu0 %334
      %v336 = vrot.slane %v335, 4
      %v337 = vadd.f32 %v335, %v336
      %v338 = vrot.slane %v337, 2
      %v339 = vadd.f32 %v337, %v338
      %v340 = vrot.slane %v339, 1
      %v341 = vadd.f32 %v339, %v340
      %s342 = vtos %v341
      %v343 = vstv %s342
      %v344 = vadd.f32 %v326, %v343
      %345 = vst [vmem:[%s261] sm:$0x1] %v344
      %p346 = scmp.lt.s32.totalorder %s21, 1
      %s347 = scalar_select %p346, %s21, 1
      %s348 = scalar_lea.vmem %s3, %s347
      %p349 = scmp.lt.s32.totalorder %s21, 1
      %s350 = scalar_select %p349, %s21, 1
      %s351 = scalar_lea.vmem %s4, %s350
      // Predicated region
      $region37: #{ohem_cross_entropy_2d.3} parent=31 // pred_check
        %p352 = pneg %p124
      $region38: #{ohem_cross_entropy_2d.3} parent=31 // pred_check_branch
        %354 = sbr.rel (%p352) target = $region40
      $region39: #{ohem_cross_entropy_2d.3} parent=31 // pred_region
        _
      $region40: #{ohem_cross_entropy_2d.3} parent=31 // pred_fallthru
        _
      // Predicated region
      $region41: #{ohem_cross_entropy_2d.3} parent=31 // pred_check
        %p355 = pneg %p150
      $region42: #{ohem_cross_entropy_2d.3} parent=31 // pred_check_branch
        %357 = sbr.rel (%p355) target = $region44
      $region43: #{ohem_cross_entropy_2d.3} parent=31 // pred_region
        _
      $region44: #{ohem_cross_entropy_2d.3} parent=31 // pred_fallthru
        _
    $region32: #{ohem_cross_entropy_2d.3} parent=5 // pred_fallthru
      _
    %p358 = scmp.le.s32.totalorder 2, %s12
    // Predicated region
    $region45: #{ohem_cross_entropy_2d.3} parent=5 // pred_check
      %p359 = pneg %p358
    $region46: #{ohem_cross_entropy_2d.3} parent=5 // pred_check_branch
      %361 = sbr.rel (%p359) target = $region48
    $region47: #{ohem_cross_entropy_2d.3} parent=5 // pred_region
      %s362 = ssub.s32 %s12, 2
      // Predicated region
      $region49: #{ohem_cross_entropy_2d.3} parent=47 // pred_check
        %p363 = pneg %p130
      $region50: #{ohem_cross_entropy_2d.3} parent=47 // pred_check_branch
        %365 = sbr.rel (%p363) target = $region52
      $region51: #{ohem_cross_entropy_2d.3} parent=47 // pred_region
        %p366 = scmp.lt.s32.totalorder %s23, 1
        %s367 = scalar_select %p366, %s23, 1
        %s368 = scalar_lea.vmem %s3, %s367
      $region52: #{ohem_cross_entropy_2d.3} parent=47 // pred_fallthru
        _
      // Predicated region
      $region53: #{ohem_cross_entropy_2d.3} parent=47 // pred_check
        %p369 = pneg %p156
      $region54: #{ohem_cross_entropy_2d.3} parent=47 // pred_check_branch
        %371 = sbr.rel (%p369) target = $region56
      $region55: #{ohem_cross_entropy_2d.3} parent=47 // pred_region
        %p372 = scmp.lt.s32.totalorder %s23, 1
        %s373 = scalar_select %p372, %s23, 1
        %s374 = scalar_lea.vmem %s4, %s373
      $region56: #{ohem_cross_entropy_2d.3} parent=47 // pred_fallthru
        _
    $region48: #{ohem_cross_entropy_2d.3} parent=5 // pred_fallthru
      _
  $region6: #{ohem_cross_entropy_2d.3} parent=0 // loop_footer
    %s16 = sadd.s32 1, %s12
  $region7: #{ohem_cross_entropy_2d.3} parent=0 // loop_footer_branch
    %11 = sbr.rel target = $region3
  $region8: #{ohem_cross_entropy_2d.3} parent=0 // loop_exit
    _

</llo_original>
